<compile_context>
chip_gen: v6e
topology: v6e:2x2x1
jax: 0.10.0
libtpu: 0.0.40
codegen_flags: <defaults>
</compile_context>

<pallas_src>
import functools

import jax
import jax.numpy as jnp
from jax.experimental import pallas as pl
from jax.experimental.pallas import tpu as pltpu


def _gcn_kernel(feat_ref, adj_ref, w_ref, b_ref, o_ref, *, weight_first):
    feat = feat_ref[...]   # (N, F_in)      current batch element (pipelined)
    adj = adj_ref[...]     # (N, N)         resident across grid steps
    w = w_ref[...]         # (F_in, F_out)  resident across grid steps
    if weight_first:
        # in_features >= out_features: features @ weight first, then adj @ tmp
        tmp = jnp.dot(feat, w, preferred_element_type=jnp.float32)    # (N, F_out)
        out = jnp.dot(adj, tmp, preferred_element_type=jnp.float32)   # (N, F_out)
    else:
        # in_features < out_features: adj @ features first, then tmp @ weight
        tmp = jnp.dot(adj, feat, preferred_element_type=jnp.float32)  # (N, F_in)
        out = jnp.dot(tmp, w, preferred_element_type=jnp.float32)     # (N, F_out)
    o_ref[...] = (out + b_ref[...]).astype(o_ref.dtype)               # bias (1, F_out) broadcast


def graph_convolution_forward(features, adj, weight, bias=None, *,
                              compute_dtype=jnp.float32):
    """features: (B, N, F_in); adj: (N, N) dense; weight: (F_in, F_out); bias: (F_out,) or None."""
    batch, n_nodes, in_features = features.shape
    in_f_w, out_features = weight.shape
    assert in_f_w == in_features, "weight/in_features mismatch"

    # Same static branch as the PyTorch module (pick the cheaper matmul order).
    weight_first = not (in_features < out_features)

    feats = features.astype(compute_dtype)
    adj_c = adj.astype(compute_dtype)
    w_c = weight.astype(compute_dtype)
    if bias is None:
        bias2 = jnp.zeros((1, out_features), jnp.float32)
    else:
        bias2 = bias.reshape(1, out_features).astype(jnp.float32)

    # VMEM budget: double-buffered per-batch tiles + resident operands, 2x headroom.
    isz = jnp.dtype(compute_dtype).itemsize
    per_step = n_nodes * in_features * isz + n_nodes * out_features * 4
    resident = (n_nodes * n_nodes * isz
                + in_features * out_features * isz
                + out_features * 4)
    vmem_limit = int(min(max(2 * (2 * per_step + resident), 4 << 20), 64 << 20))

    kernel = functools.partial(_gcn_kernel, weight_first=weight_first)

    return pl.pallas_call(
        kernel,
        out_shape=jax.ShapeDtypeStruct((batch, n_nodes, out_features), jnp.float32),
        grid=(batch,),
        in_specs=[
            # per-batch feature tile (leading batch dim squeezed out in the kernel)
            pl.BlockSpec((None, n_nodes, in_features), lambda b: (b, 0, 0)),
            # operands below are resident in VMEM across all grid steps
            pl.BlockSpec((n_nodes, n_nodes), lambda b: (0, 0)),
            pl.BlockSpec((in_features, out_features), lambda b: (0, 0)),
            pl.BlockSpec((1, out_features), lambda b: (0, 0)),
        ],
        out_specs=pl.BlockSpec((None, n_nodes, out_features), lambda b: (b, 0, 0)),
        compiler_params=pltpu.CompilerParams(
            dimension_semantics=("parallel",),
            vmem_limit_bytes=vmem_limit,
        ),
    )(feats, adj_c, w_c, bias2)


def graph_convolution_ref(features, adj, weight, bias=None):
    """Pure-JAX reference matching the PyTorch forward exactly."""
    in_features, out_features = weight.shape
    if in_features < out_features:
        tmp = jnp.einsum('nm,bmf->bnf', adj, features)   # batch_mat_mat(adj, features)
        out = tmp @ weight
    else:
        tmp = features @ weight
        out = jnp.einsum('nm,bmf->bnf', adj, tmp)         # batch_mat_mat(adj, tmp)
    if bias is not None:
        out = out + bias[None, None, :]
    return out


if __name__ == "__main__":
    key = jax.random.PRNGKey(0)
    k1, k2, k3, k4, k5, k6 = jax.random.split(key, 6)

    batch, n_nodes = 2, 64

    # Shared dense stand-in for the sparse adjacency matrix.
    adj = jax.random.normal(k2, (n_nodes, n_nodes), jnp.float32) * 0.1

    # --- Config A: in_features < out_features (adj @ features first), with bias ---
    in_f, out_f = 32, 128
    feats_a = jax.random.normal(k1, (batch, n_nodes, in_f), jnp.float32)
    w_a = jax.random.uniform(k3, (in_f, out_f), jnp.float32, -0.1, 0.1)
    b_a = jax.random.uniform(k4, (out_f,), jnp.float32, -0.1, 0.1)

    out_a = jax.block_until_ready(graph_convolution_forward(feats_a, adj, w_a, b_a))
    ref_a = graph_convolution_ref(feats_a, adj, w_a, b_a)
    assert out_a.shape == (batch, n_nodes, out_f)
    assert jnp.allclose(out_a, ref_a, atol=1e-3, rtol=1e-3), "Pallas mismatch (branch in<out)"

    # --- Config B: in_features >= out_features (features @ weight first), no bias ---
    in_f2, out_f2 = 128, 32
    feats_b = jax.random.normal(k5, (batch, n_nodes, in_f2), jnp.float32)
    w_b = jax.random.uniform(k6, (in_f2, out_f2), jnp.float32, -0.1, 0.1)

    out_b = jax.block_until_ready(graph_convolution_forward(feats_b, adj, w_b, None))
    ref_b = graph_convolution_ref(feats_b, adj, w_b, None)
    assert out_b.shape == (batch, n_nodes, out_f2)
    assert jnp.allclose(out_b, ref_b, atol=1e-3, rtol=1e-3), "Pallas mismatch (branch in>=out)"

    print("KERNEL_OK")
</pallas_src>

<mosaic_0001>
module attributes {stable_mosaic.version = 11 : i64} {
  func.func @_gcn_kernel(%arg0: i32, %arg1: memref<1x64x32xf32, #tpu.memory_space<vmem>>, %arg2: memref<64x64xf32, #tpu.memory_space<vmem>>, %arg3: memref<32x128xf32, #tpu.memory_space<vmem>>, %arg4: memref<1x128xf32, #tpu.memory_space<vmem>>, %arg5: memref<1x64x128xf32, #tpu.memory_space<vmem>>) attributes {dimension_semantics = [#tpu.dimension_semantics<parallel>], iteration_bounds = array<i64: 2>, scalar_prefetch = 0 : i64, scratch_operands = 0 : i64, tpu.core_type = #tpu.core_type<tc>, window_params = [{transform_indices = @transform_0, window_bounds = array<i64: 1, 64, 32>}, {pipeline_mode = #tpu.pipeline_mode<synchronous>, transform_indices = @transform_1, window_bounds = array<i64: 64, 64>}, {pipeline_mode = #tpu.pipeline_mode<synchronous>, transform_indices = @transform_2, window_bounds = array<i64: 32, 128>}, {pipeline_mode = #tpu.pipeline_mode<synchronous>, transform_indices = @transform_3, window_bounds = array<i64: 1, 128>}, {transform_indices = @transform_4, window_bounds = array<i64: 1, 64, 128>}]} {
    %c0 = arith.constant 0 : index
    %c0_0 = arith.constant 0 : index
    %c0_1 = arith.constant 0 : index
    %0 = vector.load %arg1[%c0, %c0_0, %c0_1] : memref<1x64x32xf32, #tpu.memory_space<vmem>>, vector<1x64x32xf32>
    %1 = vector.shape_cast %0 : vector<1x64x32xf32> to vector<64x32xf32>
    %c0_2 = arith.constant 0 : index
    %c0_3 = arith.constant 0 : index
    %2 = vector.load %arg2[%c0_2, %c0_3] : memref<64x64xf32, #tpu.memory_space<vmem>>, vector<64x64xf32>
    %c0_4 = arith.constant 0 : index
    %c0_5 = arith.constant 0 : index
    %3 = vector.load %arg3[%c0_4, %c0_5] : memref<32x128xf32, #tpu.memory_space<vmem>>, vector<32x128xf32>
    %cst = arith.constant dense<0.000000e+00> : vector<64x32xf32>
    %4 = tpu.matmul %2, %1, %cst {dimension_numbers = #tpu.dot_dimension_numbers<[1], [0], [0], [1], [0, 0, 1, 1], [], []>} : vector<64x64xf32>, vector<64x32xf32>, vector<64x32xf32> -> vector<64x32xf32>
    %cst_6 = arith.constant dense<0.000000e+00> : vector<64x128xf32>
    %5 = tpu.matmul %4, %3, %cst_6 {dimension_numbers = #tpu.dot_dimension_numbers<[1], [0], [0], [1], [0, 0, 1, 1], [], []>} : vector<64x32xf32>, vector<32x128xf32>, vector<64x128xf32> -> vector<64x128xf32>
    %c0_7 = arith.constant 0 : index
    %c0_8 = arith.constant 0 : index
    %6 = vector.load %arg4[%c0_7, %c0_8] : memref<1x128xf32, #tpu.memory_space<vmem>>, vector<1x128xf32>
    %7 = vector.broadcast %6 : vector<1x128xf32> to vector<64x128xf32>
    %8 = arith.addf %5, %7 : vector<64x128xf32>
    %c0_9 = arith.constant 0 : index
    %c0_10 = arith.constant 0 : index
    %c0_11 = arith.constant 0 : index
    %9 = vector.load %arg5[%c0_9, %c0_10, %c0_11] : memref<1x64x128xf32, #tpu.memory_space<vmem>>, vector<1x64x128xf32>
    %10 = vector.shape_cast %9 : vector<1x64x128xf32> to vector<64x128xf32>
    %11 = vector.shape_cast %8 : vector<64x128xf32> to vector<1x64x128xf32>
    tpu.vector_store %arg5[%c0_9, %c0_10, %c0_11], %11 {strides = array<i32>} : memref<1x64x128xf32, #tpu.memory_space<vmem>>, vector<1x64x128xf32>,
    return
  }
  func.func @transform_0(%arg0: i32) -> (i32, i32, i32) {
    %c0_i32 = arith.constant 0 : i32
    %c0_i32_0 = arith.constant 0 : i32
    %c0_i32_1 = arith.constant 0 : i32
    return %arg0, %c0_i32, %c0_i32_0 : i32, i32, i32
  }
  func.func @transform_1(%arg0: i32) -> (i32, i32) {
    %c0_i32 = arith.constant 0 : i32
    %c0_i32_0 = arith.constant 0 : i32
    %c0_i32_1 = arith.constant 0 : i32
    return %c0_i32, %c0_i32_0 : i32, i32
  }
  func.func @transform_2(%arg0: i32) -> (i32, i32) {
    %c0_i32 = arith.constant 0 : i32
    %c0_i32_0 = arith.constant 0 : i32
    %c0_i32_1 = arith.constant 0 : i32
    return %c0_i32, %c0_i32_0 : i32, i32
  }
  func.func @transform_3(%arg0: i32) -> (i32, i32) {
    %c0_i32 = arith.constant 0 : i32
    %c0_i32_0 = arith.constant 0 : i32
    %c0_i32_1 = arith.constant 0 : i32
    return %c0_i32, %c0_i32_0 : i32, i32
  }
  func.func @transform_4(%arg0: i32) -> (i32, i32, i32) {
    %c0_i32 = arith.constant 0 : i32
    %c0_i32_0 = arith.constant 0 : i32
    %c0_i32_1 = arith.constant 0 : i32
    return %arg0, %c0_i32, %c0_i32_0 : i32, i32, i32
  }
}

</mosaic_0001>

<llo_original>
// kernel: tpu_custom_call.1
$region0: #{tpu_custom_call.1}
  #allocation0 [shape = 'u32[]', space=smem, size = 0x4, offset = 0x4, fixed_abs, tag = 'smem constant byte address 0x4 - core index']
  #allocation1 [shape = 'u32[144,128]{1,0:T(1,128)}', space=vmem, size = 0x12000, scoped, tag = 'internal scratch']
  %s0 = inlined_call_operand.vmem [shape: f32[2,64,32], index: 0, kind: input, shape index: {}]
  %s1 = inlined_call_operand.vmem [shape: f32[64,64], index: 1, kind: input, shape index: {}]
  %s2 = inlined_call_operand.vmem [shape: f32[32,128], index: 2, kind: input, shape index: {}]
  %s3 = inlined_call_operand.vmem [shape: f32[1,128], index: 3, kind: input, shape index: {}]
  %s4 = inlined_call_operand.hbm [shape: f32[2,64,128], index: 4, kind: output, shape index: {}]
  %s5 = sld [smem:[#allocation0]]
  $region49: #{tpu_custom_call.1} parent=0
    _
  %s7 = ssub.s32 1, %s5
  %s8 = scalar_select 0, %s7, %s5
  $region1: #{tpu_custom_call.1} parent=0
    #allocation2 [shape = 'u8[65536]{0}', space=vmem, size = 0x10000, scoped, tag = 'output window, operand 0']
    #allocation3 [shape = 's32[2]{0}', space=sflag, size = 0x8, scoped, tag = 'scoped memory for tpu_custom_call.1']
    %9 = vsyncpa [#allocation3], 0
    %s10 = scalar_lea.sflag [#allocation3], 1
    %11 = vsyncpa %s10, 0
    loop: start=0, step=1, limit=4
    $region2: #{tpu_custom_call.1} parent=1 // loop_pre_header
      _
    $region3: #{tpu_custom_call.1} parent=1 // loop_header
      %s13 = sphi 0, %s17
      %p14 = scmp.ge.s32.totalorder %s13, 4
      %s23 = sphi 0, %s25
      %s26 = sphi 0, %s23
      %s27 = sphi 0, %s26
      %s43 = sphi 0, %s27
      %s47 = sphi 0, %s47
      %s49 = sphi 0, %s47
      %s50 = sphi 0, %s49
      %s64 = sphi 0, %s50
      %s68 = sphi 0, %s68
      %s70 = sphi 0, %s68
      %s71 = sphi 0, %s70
      %s85 = sphi 0, %s71
      %s89 = sphi 0, %s89
      %s91 = sphi 0, %s89
      %s92 = sphi 0, %s91
      %s106 = sphi 0, %s92
      %s112 = sphi 0, %s114
      %s115 = sphi 0, %s112
      %s116 = sphi 0, %s115
      %s132 = sphi 0, %s116
    $region4: #{tpu_custom_call.1} parent=1 // loop_header_branch
      %16 = sbr.rel (%p14) target = $region8
    $region5: #{tpu_custom_call.1} parent=1 // loop_body
      %s18 = ssub.s32 %s13, 1
      %s19 = ssub.s32 %s13, 2
      %s20 = sadd.s32 %s13, 1
      %s21 = ssub.s32 %s13, %s20
      %p22 = scmp.eq.s32.totalorder %s21, 0
      %s24 = sadd.s32 %s23, 1
      %s25 = scalar_select %p22, %s23, %s24
      %p28 = pneg %p22
      %p29 = scmp.eq.s32.totalorder %s13, 1
      %p30 = por %p28, %p29
      %p31 = scmp.ne.s32.totalorder %s23, %s26
      %p32 = scmp.eq.s32.totalorder %s13, 0
      %p33 = por %p31, %p32
      %p34 = scmp.ne.s32.totalorder %s23, %s26
      %p35 = scmp.eq.s32.totalorder %s18, 1
      %p36 = por %p34, %p35
      %p37 = scmp.ne.s32.totalorder %s26, %s27
      %p38 = scmp.eq.s32.totalorder %s18, 0
      %p39 = por %p37, %p38
      %p40 = scmp.ne.s32.totalorder %s26, %s27
      %p41 = scmp.eq.s32.totalorder %s19, 1
      %p42 = por %p40, %p41
      %p44 = scmp.ne.s32.totalorder %s27, %s43
      %p45 = scmp.eq.s32.totalorder %s19, 0
      %p46 = por %p44, %p45
      %s48 = sadd.s32 %s47, 1
      %p51 = scmp.eq.s32.totalorder %s13, 1
      %p52 = scmp.ne.s32.totalorder %s47, %s49
      %p53 = scmp.eq.s32.totalorder %s13, 0
      %p54 = por %p52, %p53
      %p55 = scmp.ne.s32.totalorder %s47, %s49
      %p56 = scmp.eq.s32.totalorder %s18, 1
      %p57 = por %p55, %p56
      %p58 = scmp.ne.s32.totalorder %s49, %s50
      %p59 = scmp.eq.s32.totalorder %s18, 0
      %p60 = por %p58, %p59
      %p61 = scmp.ne.s32.totalorder %s49, %s50
      %p62 = scmp.eq.s32.totalorder %s19, 1
      %p63 = por %p61, %p62
      %p65 = scmp.ne.s32.totalorder %s50, %s64
      %p66 = scmp.eq.s32.totalorder %s19, 0
      %p67 = por %p65, %p66
      %s69 = sadd.s32 %s68, 1
      %p72 = scmp.eq.s32.totalorder %s13, 1
      %p73 = scmp.ne.s32.totalorder %s68, %s70
      %p74 = scmp.eq.s32.totalorder %s13, 0
      %p75 = por %p73, %p74
      %p76 = scmp.ne.s32.totalorder %s68, %s70
      %p77 = scmp.eq.s32.totalorder %s18, 1
      %p78 = por %p76, %p77
      %p79 = scmp.ne.s32.totalorder %s70, %s71
      %p80 = scmp.eq.s32.totalorder %s18, 0
      %p81 = por %p79, %p80
      %p82 = scmp.ne.s32.totalorder %s70, %s71
      %p83 = scmp.eq.s32.totalorder %s19, 1
      %p84 = por %p82, %p83
      %p86 = scmp.ne.s32.totalorder %s71, %s85
      %p87 = scmp.eq.s32.totalorder %s19, 0
      %p88 = por %p86, %p87
      %s90 = sadd.s32 %s89, 1
      %p93 = scmp.eq.s32.totalorder %s13, 1
      %p94 = scmp.ne.s32.totalorder %s89, %s91
      %p95 = scmp.eq.s32.totalorder %s13, 0
      %p96 = por %p94, %p95
      %p97 = scmp.ne.s32.totalorder %s89, %s91
      %p98 = scmp.eq.s32.totalorder %s18, 1
      %p99 = por %p97, %p98
      %p100 = scmp.ne.s32.totalorder %s91, %s92
      %p101 = scmp.eq.s32.totalorder %s18, 0
      %p102 = por %p100, %p101
      %p103 = scmp.ne.s32.totalorder %s91, %s92
      %p104 = scmp.eq.s32.totalorder %s19, 1
      %p105 = por %p103, %p104
      %p107 = scmp.ne.s32.totalorder %s92, %s106
      %p108 = scmp.eq.s32.totalorder %s19, 0
      %p109 = por %p107, %p108
      %s110 = ssub.s32 %s13, %s20
      %p111 = scmp.eq.s32.totalorder %s110, 0
      %s113 = sadd.s32 %s112, 1
      %s114 = scalar_select %p111, %s112, %s113
      %p117 = pneg %p111
      %p118 = scmp.eq.s32.totalorder %s13, 1
      %p119 = por %p117, %p118
      %p120 = scmp.ne.s32.totalorder %s112, %s115
      %p121 = scmp.eq.s32.totalorder %s13, 0
      %p122 = por %p120, %p121
      %p123 = scmp.ne.s32.totalorder %s112, %s115
      %p124 = scmp.eq.s32.totalorder %s18, 1
      %p125 = por %p123, %p124
      %p126 = scmp.ne.s32.totalorder %s115, %s116
      %p127 = scmp.eq.s32.totalorder %s18, 0
      %p128 = por %p126, %p127
      %p129 = scmp.ne.s32.totalorder %s115, %s116
      %p130 = scmp.eq.s32.totalorder %s19, 1
      %p131 = por %p129, %p130
      %p133 = scmp.ne.s32.totalorder %s116, %s132
      %p134 = scmp.eq.s32.totalorder %s19, 0
      %p135 = por %p133, %p134
      %p136 = scmp.le.s32.totalorder 1, %s13
      %p137 = scmp.lt.s32.totalorder %s13, 3
      %p138 = pnand %p136, %p137
      %p139 = pneg %p138
      // Predicated region
      $region9: #{tpu_custom_call.1} parent=5 // pred_check
        _
      $region10: #{tpu_custom_call.1} parent=5 // pred_check_branch
        %141 = sbr.rel (%p138) target = $region12
      $region11: #{tpu_custom_call.1} parent=5 // pred_region
        %s142 = ssub.s32 %s13, 1
        // Predicated region
        $region13: #{tpu_custom_call.1} parent=11 // pred_check
          %p143 = pneg %p60
        $region14: #{tpu_custom_call.1} parent=11 // pred_check_branch
          %145 = sbr.rel (%p143) target = $region16
        $region15: #{tpu_custom_call.1} parent=11 // pred_region
          _
        $region16: #{tpu_custom_call.1} parent=11 // pred_fallthru
          _
        // Predicated region
        $region17: #{tpu_custom_call.1} parent=11 // pred_check
          %p146 = pneg %p81
        $region18: #{tpu_custom_call.1} parent=11 // pred_check_branch
          %148 = sbr.rel (%p146) target = $region20
        $region19: #{tpu_custom_call.1} parent=11 // pred_region
          _
        $region20: #{tpu_custom_call.1} parent=11 // pred_fallthru
          _
        // Predicated region
        $region21: #{tpu_custom_call.1} parent=11 // pred_check
          %p149 = pneg %p102
        $region22: #{tpu_custom_call.1} parent=11 // pred_check_branch
          %151 = sbr.rel (%p149) target = $region24
        $region23: #{tpu_custom_call.1} parent=11 // pred_region
          _
        $region24: #{tpu_custom_call.1} parent=11 // pred_fallthru
          _
      $region12: #{tpu_custom_call.1} parent=5 // pred_fallthru
        _
      %p152 = scmp.lt.s32.totalorder %s13, 2
      // Predicated region
      $region25: #{tpu_custom_call.1} parent=5 // pred_check
        %p153 = pneg %p152
      $region26: #{tpu_custom_call.1} parent=5 // pred_check_branch
        %155 = sbr.rel (%p153) target = $region28
      $region27: #{tpu_custom_call.1} parent=5 // pred_region
        // Predicated region
        $region29: #{tpu_custom_call.1} parent=27 // pred_check
          %p156 = pneg %p33
        $region30: #{tpu_custom_call.1} parent=27 // pred_check_branch
          %158 = sbr.rel (%p156) target = $region32
        $region31: #{tpu_custom_call.1} parent=27 // pred_region
          %p159 = scmp.lt.s32.totalorder %s13, 1
          %s160 = scalar_select %p159, %s13, 1
          %s161 = smul.addr %s160, 8
          %s162 = smul.addr %s161, 8
          %s163 = scalar_lea.vmem %s0, %s162
        $region32: #{tpu_custom_call.1} parent=27 // pred_fallthru
          _
      $region28: #{tpu_custom_call.1} parent=5 // pred_fallthru
        _
      %p164 = scmp.le.s32.totalorder 1, %s13
      %p165 = scmp.lt.s32.totalorder %s13, 3
      %p166 = pnand %p164, %p165
      %p167 = pneg %p166
      // Predicated region
      $region33: #{tpu_custom_call.1} parent=5 // pred_check
        _
      $region34: #{tpu_custom_call.1} parent=5 // pred_check_branch
        %169 = sbr.rel (%p166) target = $region36
      $region35: #{tpu_custom_call.1} parent=5 // pred_region
        %s170 = ssub.s32 %s13, 1
        %p171 = scmp.lt.s32.totalorder %s18, 1
        %s172 = scalar_select %p171, %s18, 1
        %s173 = smul.addr %s172, 8
        %s174 = smul.addr %s173, 8
        %s175 = scalar_lea.vmem %s0, %s174
        %p176 = pneg %p39
        %p177 = pneg %p36
        %p178 = pneg %p60
        %p179 = pneg %p57
        %p180 = pneg %p81
        %p181 = pneg %p78
        %p182 = pneg %p102
        %p183 = pneg %p99
        %p184 = pneg %p128
        %p185 = pneg %p125
        %s186 = sand.u32 %s115, 1
        %s187 = scalar_lea.sflag [#allocation3], %s186
        %s188 = sand.u32 %s115, 1
        %s189 = smul.addr %s188, 64
        %s190 = scalar_lea.vmem [#allocation2], %s189
        %p191 = scmp.lt.s32.totalorder %s18, 1
        %s192 = scalar_select %p191, %s18, 1
        %s193 = smul.addr %s192, 8
        %s194 = smul.addr %s193, 8
        %s195 = scalar_lea.vmem %s0, %s194
        %v196 = vld [vmem:[%s195] sm:$0xff]
        %v197 = vld [vmem:[%s195 + $0x8] sm:$0xff]
        %v198 = vld [vmem:[%s195 + $0x10] sm:$0xff]
        %v199 = vld [vmem:[%s195 + $0x18] sm:$0xff]
        %v200 = vld [vmem:[%s195 + $0x20] sm:$0xff]
        %v201 = vld [vmem:[%s195 + $0x28] sm:$0xff]
        %v202 = vld [vmem:[%s195 + $0x30] sm:$0xff]
        %v203 = vld [vmem:[%s195 + $0x38] sm:$0xff]
        %v204 = vld [vmem:[%s1] sm:$0xff]
        %v205 = vld [vmem:[%s1 + $0x8] sm:$0xff]
        %v206 = vld [vmem:[%s1 + $0x10] sm:$0xff]
        %v207 = vld [vmem:[%s1 + $0x18] sm:$0xff]
        %v208 = vld [vmem:[%s1 + $0x20] sm:$0xff]
        %v209 = vld [vmem:[%s1 + $0x28] sm:$0xff]
        %v210 = vld [vmem:[%s1 + $0x30] sm:$0xff]
        %v211 = vld [vmem:[%s1 + $0x38] sm:$0xff]
        %v212 = vld [vmem:[%s2] sm:$0xff]
        %v213 = vld [vmem:[%s2 + $0x8] sm:$0xff]
        %v214 = vld [vmem:[%s2 + $0x10] sm:$0xff]
        %v215 = vld [vmem:[%s2 + $0x18] sm:$0xff]
        %vm216 = vcmask 523264
        %v218 = vsel %vm216, %v204, 0
        %v221 = vsel %vm216, %v205, 0
        %v224 = vsel %vm216, %v206, 0
        %v227 = vsel %vm216, %v207, 0
        %v230 = vsel %vm216, %v208, 0
        %v233 = vsel %vm216, %v209, 0
        %v236 = vsel %vm216, %v210, 0
        %v239 = vsel %vm216, %v211, 0
        %241 = vmatprep.subr.mxu0 0.0
        %242 = vmatpush1.msra.mxu0 0.0
        %243 = vmatprep.subr.mxu0 0.0
        %244 = vmatpush1.msra.mxu0 0.0
        %245 = vmatprep.subr.mxu0 0.0
        %246 = vmatpush1.msra.mxu0 0.0
        %247 = vmatprep.subr.mxu0 0.0
        %248 = vmatpush1.msra.mxu0 0.0
        %249 = vmatprep.subr.mxu0 0.0
        %250 = vmatpush1.msra.mxu0 0.0
        %251 = vmatprep.subr.mxu0 0.0
        %252 = vmatpush1.msra.mxu0 0.0
        %253 = vmatprep.subr.mxu0 0.0
        %254 = vmatpush1.msra.mxu0 0.0
        %255 = vmatprep.subr.mxu0 0.0
        %256 = vmatpush1.msra.mxu0 0.0
        %257 = vmatprep.subr.mxu0 0.0
        %258 = vmatpush1.msra.mxu0 %v203
        %259 = vmatprep.subr.mxu0 0.0
        %260 = vmatpush1.msra.mxu0 %v202
        %261 = vmatprep.subr.mxu0 0.0
        %262 = vmatpush1.msra.mxu0 %v201
        %263 = vmatprep.subr.mxu0 0.0
        %264 = vmatpush1.msra.mxu0 %v200
        %265 = vmatprep.subr.mxu0 0.0
        %266 = vmatpush1.msra.mxu0 %v199
        %267 = vmatprep.subr.mxu0 0.0
        %268 = vmatpush1.msra.mxu0 %v198
        %269 = vmatprep.subr.mxu0 0.0
        %270 = vmatpush1.msra.mxu0 %v197
        %271 = vmatprep.subr.mxu0 0.0
        %272 = vmatpush1.msra.mxu0 %v196
        %273 = vmatprep.subr.mxu0 0.0
        %274 = vmatpush2.msra.mxu0 0.0
        %275 = vmatprep.subr.mxu0 0.0
        %276 = vmatpush2.msra.mxu0 0.0
        %277 = vmatprep.subr.mxu0 0.0
        %278 = vmatpush2.msra.mxu0 0.0
        %279 = vmatprep.subr.mxu0 0.0
        %280 = vmatpush2.msra.mxu0 0.0
        %281 = vmatprep.subr.mxu0 0.0
        %282 = vmatpush2.msra.mxu0 0.0
        %283 = vmatprep.subr.mxu0 0.0
        %284 = vmatpush2.msra.mxu0 0.0
        %285 = vmatprep.subr.mxu0 0.0
        %286 = vmatpush2.msra.mxu0 0.0
        %287 = vmatprep.subr.mxu0 0.0
        %288 = vmatpush2.msra.mxu0 0.0
        %289 = vmatprep.subr.mxu0 0.0
        %290 = vmatpush2.msra.mxu0 0.0
        %291 = vmatprep.subr.mxu0 0.0
        %292 = vmatpush2.msra.mxu0 0.0
        %293 = vmatprep.subr.mxu0 0.0
        %294 = vmatpush2.msra.mxu0 0.0
        %295 = vmatprep.subr.mxu0 0.0
        %296 = vmatpush2.msra.mxu0 0.0
        %297 = vmatprep.subr.mxu0 0.0
        %298 = vmatpush2.msra.mxu0 0.0
        %299 = vmatprep.subr.mxu0 0.0
        %300 = vmatpush2.msra.mxu0 0.0
        %301 = vmatprep.subr.mxu0 0.0
        %302 = vmatpush2.msra.mxu0 0.0
        %303 = vmatprep.subr.mxu0 0.0
        %304 = vmatpush2.msra.mxu0 0.0
        %305 = vmatprep.mubr.f32.mxu0 0.0
        %306 = vmatmul.mubr.f32.gmra.mxu0 %v218
        %v307 = vpop.f32.mrf.mxu0
        %v308 = vadd.f32 0.0, %v307
        %v309 = vpop.f32.mrf.mxu0
        %310 = vmatprep.mubr.f32.mxu0 0.0
        %311 = vmatmul.mubr.f32.gmra.mxu0 %v221
        %v312 = vpop.f32.mrf.mxu0
        %v313 = vadd.f32 0.0, %v312
        %v314 = vpop.f32.mrf.mxu0
        %315 = vmatprep.mubr.f32.mxu0 0.0
        %316 = vmatmul.mubr.f32.gmra.mxu0 %v224
        %v317 = vpop.f32.mrf.mxu0
        %v318 = vadd.f32 0.0, %v317
        %v319 = vpop.f32.mrf.mxu0
        %320 = vmatprep.mubr.f32.mxu0 0.0
        %321 = vmatmul.mubr.f32.gmra.mxu0 %v227
        %v322 = vpop.f32.mrf.mxu0
        %v323 = vadd.f32 0.0, %v322
        %v324 = vpop.f32.mrf.mxu0
        %325 = vmatprep.mubr.f32.mxu0 0.0
        %326 = vmatmul.mubr.f32.gmra.mxu0 %v230
        %v327 = vpop.f32.mrf.mxu0
        %v328 = vadd.f32 0.0, %v327
        %v329 = vpop.f32.mrf.mxu0
        %330 = vmatprep.mubr.f32.mxu0 0.0
        %331 = vmatmul.mubr.f32.gmra.mxu0 %v233
        %v332 = vpop.f32.mrf.mxu0
        %v333 = vadd.f32 0.0, %v332
        %v334 = vpop.f32.mrf.mxu0
        %335 = vmatprep.mubr.f32.mxu0 0.0
        %336 = vmatmul.mubr.f32.gmra.mxu0 %v236
        %v337 = vpop.f32.mrf.mxu0
        %v338 = vadd.f32 0.0, %v337
        %v339 = vpop.f32.mrf.mxu0
        %340 = vmatprep.mubr.f32.mxu0 0.0
        %341 = vmatmul.mubr.f32.gmra.mxu0 %v239
        %v342 = vpop.f32.mrf.mxu0
        %v343 = vadd.f32 0.0, %v342
        %v344 = vpop.f32.mrf.mxu0
        %345 = vdwg.mxu0
        %v346 = vld [vmem:[%s3] sm:$0x1]
        %v348 = vlaneseq
        %v349 = vshrl.u32 %v348, 7
        %v350 = vsub.s32 0, %v349
        %v351 = vrot.slane %v346, %v350
        %vm353 = vcmask 261120
        %v355 = vsel %vm353, %v308, 0
        %v358 = vsel %vm353, %v313, 0
        %v361 = vsel %vm353, %v318, 0
        %v364 = vsel %vm353, %v323, 0
        %v367 = vsel %vm353, %v328, 0
        %v370 = vsel %vm353, %v333, 0
        %v373 = vsel %vm353, %v338, 0
        %v376 = vsel %vm353, %v343, 0
        %378 = vmatprep.subr.mxu0 0.0
        %379 = vmatpush1.msra.mxu0 0.0
        %380 = vmatprep.subr.mxu0 0.0
        %381 = vmatpush1.msra.mxu0 0.0
        %382 = vmatprep.subr.mxu0 0.0
        %383 = vmatpush1.msra.mxu0 0.0
        %384 = vmatprep.subr.mxu0 0.0
        %385 = vmatpush1.msra.mxu0 0.0
        %386 = vmatprep.subr.mxu0 0.0
        %387 = vmatpush1.msra.mxu0 0.0
        %388 = vmatprep.subr.mxu0 0.0
        %389 = vmatpush1.msra.mxu0 0.0
        %390 = vmatprep.subr.mxu0 0.0
        %391 = vmatpush1.msra.mxu0 0.0
        %392 = vmatprep.subr.mxu0 0.0
        %393 = vmatpush1.msra.mxu0 0.0
        %394 = vmatprep.subr.mxu0 0.0
        %395 = vmatpush1.msra.mxu0 0.0
        %396 = vmatprep.subr.mxu0 0.0
        %397 = vmatpush1.msra.mxu0 0.0
        %398 = vmatprep.subr.mxu0 0.0
        %399 = vmatpush1.msra.mxu0 0.0
        %400 = vmatprep.subr.mxu0 0.0
        %401 = vmatpush1.msra.mxu0 0.0
        %402 = vmatprep.subr.mxu0 0.0
        %403 = vmatpush1.msra.mxu0 %v215
        %404 = vmatprep.subr.mxu0 0.0
        %405 = vmatpush1.msra.mxu0 %v214
        %406 = vmatprep.subr.mxu0 0.0
        %407 = vmatpush1.msra.mxu0 %v213
        %408 = vmatprep.subr.mxu0 0.0
        %409 = vmatpush1.msra.mxu0 %v212
        %410 = vmatprep.subr.mxu0 0.0
        %411 = vmatpush2.msra.mxu0 0.0
        %412 = vmatprep.subr.mxu0 0.0
        %413 = vmatpush2.msra.mxu0 0.0
        %414 = vmatprep.subr.mxu0 0.0
        %415 = vmatpush2.msra.mxu0 0.0
        %416 = vmatprep.subr.mxu0 0.0
        %417 = vmatpush2.msra.mxu0 0.0
        %418 = vmatprep.subr.mxu0 0.0
        %419 = vmatpush2.msra.mxu0 0.0
        %420 = vmatprep.subr.mxu0 0.0
        %421 = vmatpush2.msra.mxu0 0.0
        %422 = vmatprep.subr.mxu0 0.0
        %423 = vmatpush2.msra.mxu0 0.0
        %424 = vmatprep.subr.mxu0 0.0
        %425 = vmatpush2.msra.mxu0 0.0
        %426 = vmatprep.subr.mxu0 0.0
        %427 = vmatpush2.msra.mxu0 0.0
        %428 = vmatprep.subr.mxu0 0.0
        %429 = vmatpush2.msra.mxu0 0.0
        %430 = vmatprep.subr.mxu0 0.0
        %431 = vmatpush2.msra.mxu0 0.0
        %432 = vmatprep.subr.mxu0 0.0
        %433 = vmatpush2.msra.mxu0 0.0
        %434 = vmatprep.subr.mxu0 0.0
        %435 = vmatpush2.msra.mxu0 0.0
        %436 = vmatprep.subr.mxu0 0.0
        %437 = vmatpush2.msra.mxu0 0.0
        %438 = vmatprep.subr.mxu0 0.0
        %439 = vmatpush2.msra.mxu0 0.0
        %440 = vmatprep.subr.mxu0 0.0
        %441 = vmatpush2.msra.mxu0 0.0
        %442 = vmatprep.mubr.f32.mxu0 0.0
        %443 = vmatmul.mubr.f32.gmra.mxu0 %v355
        %v444 = vpop.f32.mrf.mxu0
        %v445 = vadd.f32 %v351, %v444
        %v446 = vpop.f32.mrf.mxu0
        %447 = vmatprep.mubr.f32.mxu0 0.0
        %448 = vmatmul.mubr.f32.gmra.mxu0 %v358
        %v449 = vpop.f32.mrf.mxu0
        %v450 = vadd.f32 %v351, %v449
        %v451 = vpop.f32.mrf.mxu0
        %452 = vmatprep.mubr.f32.mxu0 0.0
        %453 = vmatmul.mubr.f32.gmra.mxu0 %v361
        %v454 = vpop.f32.mrf.mxu0
        %v455 = vadd.f32 %v351, %v454
        %v456 = vpop.f32.mrf.mxu0
        %457 = vmatprep.mubr.f32.mxu0 0.0
        %458 = vmatmul.mubr.f32.gmra.mxu0 %v364
        %v459 = vpop.f32.mrf.mxu0
        %v460 = vadd.f32 %v351, %v459
        %v461 = vpop.f32.mrf.mxu0
        %462 = vmatprep.mubr.f32.mxu0 0.0
        %463 = vmatmul.mubr.f32.gmra.mxu0 %v367
        %v464 = vpop.f32.mrf.mxu0
        %v465 = vadd.f32 %v351, %v464
        %v466 = vpop.f32.mrf.mxu0
        %467 = vmatprep.mubr.f32.mxu0 0.0
        %468 = vmatmul.mubr.f32.gmra.mxu0 %v370
        %v469 = vpop.f32.mrf.mxu0
        %v470 = vadd.f32 %v351, %v469
        %v471 = vpop.f32.mrf.mxu0
        %472 = vmatprep.mubr.f32.mxu0 0.0
        %473 = vmatmul.mubr.f32.gmra.mxu0 %v373
        %v474 = vpop.f32.mrf.mxu0
        %v475 = vadd.f32 %v351, %v474
        %v476 = vpop.f32.mrf.mxu0
        %477 = vmatprep.mubr.f32.mxu0 0.0
        %478 = vmatmul.mubr.f32.gmra.mxu0 %v376
        %v479 = vpop.f32.mrf.mxu0
        %v480 = vadd.f32 %v351, %v479
        %v481 = vpop.f32.mrf.mxu0
        %482 = vdwg.mxu0
        %483 = vst [vmem:[%s190] sm:$0xff] %v445
        %484 = vst [vmem:[%s190 + $0x8] sm:$0xff] %v450
        %485 = vst [vmem:[%s190 + $0x10] sm:$0xff] %v455
        %486 = vst [vmem:[%s190 + $0x18] sm:$0xff] %v460
        %487 = vst [vmem:[%s190 + $0x20] sm:$0xff] %v465
        %488 = vst [vmem:[%s190 + $0x28] sm:$0xff] %v470
        %489 = vst [vmem:[%s190 + $0x30] sm:$0xff] %v475
        %490 = vst [vmem:[%s190 + $0x38] sm:$0xff] %v480
        %s491 = sand.u32 %s115, 1
        %s492 = scalar_lea.sflag [#allocation3], %s491
        %s493 = sand.u32 %s115, 1
        %s494 = smul.addr %s493, 64
        %s495 = scalar_lea.vmem [#allocation2], %s494
        // Predicated region
        $region37: #{tpu_custom_call.1} parent=35 // pred_check
          %p496 = pneg %p125
        $region38: #{tpu_custom_call.1} parent=35 // pred_check_branch
          %498 = sbr.rel (%p496) target = $region40
        $region39: #{tpu_custom_call.1} parent=35 // pred_region
          %s500 = ssub.s32 1024, 1024
          %501 = vsyncadd %s492, %s500
          %s502 = smul.addr %s18, 8
          %s503 = smul.addr %s502, 128
          %s504 = scalar_lea.hbm %s4, %s503
          %s505 = sshll.u32 %s495, 4
          %s506 = int_to_ptr.vmem [resolvable:$true] %s505
          %511 = dma.vmem_to_hbm [thread:$0]  %s506, 1024, %s504, %s492, 128, 128, 8
        $region40: #{tpu_custom_call.1} parent=35 // pred_fallthru
          _
      $region36: #{tpu_custom_call.1} parent=5 // pred_fallthru
        _
      %p512 = scmp.le.s32.totalorder 2, %s13
      // Predicated region
      $region41: #{tpu_custom_call.1} parent=5 // pred_check
        %p513 = pneg %p512
      $region42: #{tpu_custom_call.1} parent=5 // pred_check_branch
        %515 = sbr.rel (%p513) target = $region44
      $region43: #{tpu_custom_call.1} parent=5 // pred_region
        %s516 = ssub.s32 %s13, 2
        // Predicated region
        $region45: #{tpu_custom_call.1} parent=43 // pred_check
          %p517 = pneg %p131
        $region46: #{tpu_custom_call.1} parent=43 // pred_check_branch
          %519 = sbr.rel (%p517) target = $region48
        $region47: #{tpu_custom_call.1} parent=43 // pred_region
          %s520 = sand.u32 %s116, 1
          %s521 = scalar_lea.sflag [#allocation3], %s520
          %s522 = sand.u32 %s116, 1
          %s523 = smul.addr %s522, 64
          %s524 = scalar_lea.vmem [#allocation2], %s523
          %525 = dma.done %s521, 1024
        $region48: #{tpu_custom_call.1} parent=43 // pred_fallthru
          _
      $region44: #{tpu_custom_call.1} parent=5 // pred_fallthru
        _
    $region6: #{tpu_custom_call.1} parent=1 // loop_footer
      %s17 = sadd.s32 1, %s13
    $region7: #{tpu_custom_call.1} parent=1 // loop_footer_branch
      %12 = sbr.rel target = $region3
    $region8: #{tpu_custom_call.1} parent=1 // loop_exit
      _
    %526 = vsyncpa [#allocation3], 1
    %s527 = scalar_lea.sflag [#allocation3], 1
    %528 = vsyncpa %s527, 1

</llo_original>
